<compile_context>
chip_gen: v7x
topology: tpu7x:2x2x1
jax: 0.10.0
libtpu: 0.0.40
codegen_flags: <defaults>
</compile_context>

<pallas_src>
import jax
import jax.numpy as jnp
from jax.experimental import pallas as pl
from jax.experimental.pallas import tpu as pltpu


def _round_up(v, m):
    return ((v + m - 1) // m) * m


def _encoder_kernel(x_ref, y_ref, w1x_ref, w1y_ref, b1_ref, w2_ref, b2_ref,
                    out_ref):
    # Feed the MXU bf16 operands, accumulate in f32.
    x = x_ref[...].astype(jnp.bfloat16)
    y = y_ref[...].astype(jnp.bfloat16)
    # Split first layer: concat(x, y) @ w1 == x @ w1[:xd] + y @ w1[xd:].
    h = jnp.dot(x, w1x_ref[...], preferred_element_type=jnp.float32)
    h = h + jnp.dot(y, w1y_ref[...], preferred_element_type=jnp.float32)
    h = jnp.maximum(h + b1_ref[...], 0.0)                  # bias bcast (1, H)
    o = jnp.dot(h.astype(jnp.bfloat16), w2_ref[...],
                preferred_element_type=jnp.float32)
    out_ref[...] = (o + b2_ref[...]).astype(out_ref.dtype)


def context_encoder_pallas(x, y, params, *, row_tile=512):
    """x,y -> Linear(concat) -> ReLU -> Linear, row-tiled Pallas pipeline."""
    w1x, w1y = params["w1x"], params["w1y"]
    b1, w2, b2 = params["b1"], params["w2"], params["b2"]

    n, x_dim = x.shape
    _, y_dim = y.shape
    h_dim = w1x.shape[1]
    r_dim = w2.shape[1]

    # Row tile: multiple of 16 (covers f32/bf16 sublane packing); large enough
    # to amortize the ~0.35us/step grid overhead, small enough for v7x VMEM.
    tn = min(row_tile, _round_up(n, 16))
    n_pad = _round_up(n, tn)
    if n_pad != n:
        pad = n_pad - n
        x = jnp.pad(x, ((0, pad), (0, 0)))
        y = jnp.pad(y, ((0, pad), (0, 0)))

    grid = (n_pad // tn,)

    itemsize = lambda a: a.size * a.dtype.itemsize
    flops = 2 * n_pad * ((x_dim + y_dim) * h_dim + h_dim * r_dim)
    bytes_accessed = (itemsize(x) + itemsize(y) + itemsize(w1x) + itemsize(w1y)
                      + itemsize(b1) + itemsize(w2) + itemsize(b2)
                      + n_pad * r_dim * 4)

    out = pl.pallas_call(
        _encoder_kernel,
        out_shape=jax.ShapeDtypeStruct((n_pad, r_dim), jnp.float32),
        grid=grid,
        in_specs=[
            # Row-streamed activations (pipelined along the grid).
            pl.BlockSpec((tn, x_dim), lambda i: (i, 0)),
            pl.BlockSpec((tn, y_dim), lambda i: (i, 0)),
            # Weights / biases: constant index_map -> VMEM-resident.
            pl.BlockSpec((x_dim, h_dim), lambda i: (0, 0)),
            pl.BlockSpec((y_dim, h_dim), lambda i: (0, 0)),
            pl.BlockSpec((1, h_dim), lambda i: (0, 0)),
            pl.BlockSpec((h_dim, r_dim), lambda i: (0, 0)),
            pl.BlockSpec((1, r_dim), lambda i: (0, 0)),
        ],
        out_specs=pl.BlockSpec((tn, r_dim), lambda i: (i, 0)),
        compiler_params=pltpu.CompilerParams(
            dimension_semantics=("parallel",),
        ),
        cost_estimate=pl.CostEstimate(
            flops=flops, transcendentals=0, bytes_accessed=bytes_accessed),
    )(x, y, w1x, w1y, b1, w2, b2)

    return out[:n]


def single_context_ndp_encoder_audio(x, y, _unused, params):
    """Forward pass of SingleContextNDPEncoderAudio: returns (output, output)."""
    output = context_encoder_pallas(x, y, params)
    return (output, output)


def init_params(key, x_dim, y_dim, h_dim, r_dim):
    k1, k2, k3, k4 = jax.random.split(key, 4)
    d_in = x_dim + y_dim
    # Deterministic synthetic weights (no checkpoint load).
    w1 = jax.random.normal(k1, (d_in, h_dim), jnp.float32) * (1.0 / jnp.sqrt(d_in))
    b1 = jax.random.normal(k2, (1, h_dim), jnp.float32) * 0.01
    w2 = jax.random.normal(k3, (h_dim, r_dim), jnp.float32) * (1.0 / jnp.sqrt(h_dim))
    b2 = jax.random.normal(k4, (1, r_dim), jnp.float32) * 0.01
    return {
        # First-layer weight pre-split along the concat axis, stored bf16.
        "w1x": w1[:x_dim].astype(jnp.bfloat16),
        "w1y": w1[x_dim:].astype(jnp.bfloat16),
        "b1": b1,                                   # biases stay f32
        "w2": w2.astype(jnp.bfloat16),
        "b2": b2,
    }


if __name__ == "__main__":
    key = jax.random.PRNGKey(0)
    kx, ky, kp = jax.random.split(key, 3)

    batch_size, num_points = 2, 8
    x_dim, y_dim, h_dim, r_dim = 4, 4, 32, 32
    N = batch_size * num_points                      # (batch_size*num_points, dim)

    x = jax.random.normal(kx, (N, x_dim), jnp.float32)
    y = jax.random.normal(ky, (N, y_dim), jnp.float32)
    params = init_params(kp, x_dim, y_dim, h_dim, r_dim)

    out_l0, out_d = single_context_ndp_encoder_audio(x, y, None, params)
    jax.block_until_ready(out_l0)
    jax.block_until_ready(out_d)

    # Pure-JAX reference mirroring the kernel's bf16-operand / f32-accumulate math.
    xb = x.astype(jnp.bfloat16)
    yb = y.astype(jnp.bfloat16)
    h_ref = (jnp.dot(xb, params["w1x"], preferred_element_type=jnp.float32)
             + jnp.dot(yb, params["w1y"], preferred_element_type=jnp.float32)
             + params["b1"])
    h_ref = jnp.maximum(h_ref, 0.0)
    ref = (jnp.dot(h_ref.astype(jnp.bfloat16), params["w2"],
                   preferred_element_type=jnp.float32) + params["b2"])

    assert out_l0.shape == (N, r_dim) and out_d.shape == (N, r_dim)
    assert jnp.allclose(out_l0, ref, atol=1e-3, rtol=1e-3), \
        float(jnp.max(jnp.abs(out_l0 - ref)))
    assert jnp.allclose(out_l0, out_d)               # module returns (output, output)

    print("KERNEL_OK")
</pallas_src>

<mosaic_0001>
module attributes {stable_mosaic.version = 11 : i64} {
  func.func @_encoder_kernel(%arg0: i32, %arg1: memref<16x4xf32, #tpu.memory_space<vmem>>, %arg2: memref<16x4xf32, #tpu.memory_space<vmem>>, %arg3: memref<4x32xbf16, #tpu.memory_space<vmem>>, %arg4: memref<4x32xbf16, #tpu.memory_space<vmem>>, %arg5: memref<1x32xf32, #tpu.memory_space<vmem>>, %arg6: memref<32x32xbf16, #tpu.memory_space<vmem>>, %arg7: memref<1x32xf32, #tpu.memory_space<vmem>>, %arg8: memref<16x32xf32, #tpu.memory_space<vmem>>) attributes {dimension_semantics = [#tpu.dimension_semantics<parallel>], iteration_bounds = array<i64: 1>, scalar_prefetch = 0 : i64, scratch_operands = 0 : i64, tpu.core_type = #tpu.core_type<tc>, window_params = [{transform_indices = @transform_0, window_bounds = array<i64: 16, 4>}, {transform_indices = @transform_1, window_bounds = array<i64: 16, 4>}, {pipeline_mode = #tpu.pipeline_mode<synchronous>, transform_indices = @transform_2, window_bounds = array<i64: 4, 32>}, {pipeline_mode = #tpu.pipeline_mode<synchronous>, transform_indices = @transform_3, window_bounds = array<i64: 4, 32>}, {pipeline_mode = #tpu.pipeline_mode<synchronous>, transform_indices = @transform_4, window_bounds = array<i64: 1, 32>}, {pipeline_mode = #tpu.pipeline_mode<synchronous>, transform_indices = @transform_5, window_bounds = array<i64: 32, 32>}, {pipeline_mode = #tpu.pipeline_mode<synchronous>, transform_indices = @transform_6, window_bounds = array<i64: 1, 32>}, {transform_indices = @transform_7, window_bounds = array<i64: 16, 32>}]} {
    %c0 = arith.constant 0 : index
    %c0_0 = arith.constant 0 : index
    %0 = vector.load %arg1[%c0, %c0_0] : memref<16x4xf32, #tpu.memory_space<vmem>>, vector<16x4xf32>
    %1 = arith.truncf %0 : vector<16x4xf32> to vector<16x4xbf16>
    %c0_1 = arith.constant 0 : index
    %c0_2 = arith.constant 0 : index
    %2 = vector.load %arg2[%c0_1, %c0_2] : memref<16x4xf32, #tpu.memory_space<vmem>>, vector<16x4xf32>
    %3 = arith.truncf %2 : vector<16x4xf32> to vector<16x4xbf16>
    %c0_3 = arith.constant 0 : index
    %c0_4 = arith.constant 0 : index
    %4 = vector.load %arg3[%c0_3, %c0_4] : memref<4x32xbf16, #tpu.memory_space<vmem>>, vector<4x32xbf16>
    %cst = arith.constant dense<0.000000e+00> : vector<16x32xf32>
    %5 = tpu.matmul %1, %4, %cst {dimension_numbers = #tpu.dot_dimension_numbers<[1], [0], [0], [1], [0, 0, 1, 1], [], []>} : vector<16x4xbf16>, vector<4x32xbf16>, vector<16x32xf32> -> vector<16x32xf32>
    %c0_5 = arith.constant 0 : index
    %c0_6 = arith.constant 0 : index
    %6 = vector.load %arg4[%c0_5, %c0_6] : memref<4x32xbf16, #tpu.memory_space<vmem>>, vector<4x32xbf16>
    %cst_7 = arith.constant dense<0.000000e+00> : vector<16x32xf32>
    %7 = tpu.matmul %3, %6, %cst_7 {dimension_numbers = #tpu.dot_dimension_numbers<[1], [0], [0], [1], [0, 0, 1, 1], [], []>} : vector<16x4xbf16>, vector<4x32xbf16>, vector<16x32xf32> -> vector<16x32xf32>
    %8 = arith.addf %5, %7 : vector<16x32xf32>
    %c0_8 = arith.constant 0 : index
    %c0_9 = arith.constant 0 : index
    %9 = vector.load %arg5[%c0_8, %c0_9] : memref<1x32xf32, #tpu.memory_space<vmem>>, vector<1x32xf32>
    %10 = vector.broadcast %9 : vector<1x32xf32> to vector<16x32xf32>
    %11 = arith.addf %8, %10 : vector<16x32xf32>
    %cst_10 = arith.constant 0.000000e+00 : f32
    %12 = vector.broadcast %cst_10 : f32 to vector<16x32xf32>
    %13 = arith.maximumf %11, %12 : vector<16x32xf32>
    %14 = arith.truncf %13 : vector<16x32xf32> to vector<16x32xbf16>
    %c0_11 = arith.constant 0 : index
    %c0_12 = arith.constant 0 : index
    %15 = vector.load %arg6[%c0_11, %c0_12] : memref<32x32xbf16, #tpu.memory_space<vmem>>, vector<32x32xbf16>
    %cst_13 = arith.constant dense<0.000000e+00> : vector<16x32xf32>
    %16 = tpu.matmul %14, %15, %cst_13 {dimension_numbers = #tpu.dot_dimension_numbers<[1], [0], [0], [1], [0, 0, 1, 1], [], []>} : vector<16x32xbf16>, vector<32x32xbf16>, vector<16x32xf32> -> vector<16x32xf32>
    %c0_14 = arith.constant 0 : index
    %c0_15 = arith.constant 0 : index
    %17 = vector.load %arg7[%c0_14, %c0_15] : memref<1x32xf32, #tpu.memory_space<vmem>>, vector<1x32xf32>
    %18 = vector.broadcast %17 : vector<1x32xf32> to vector<16x32xf32>
    %19 = arith.addf %16, %18 : vector<16x32xf32>
    %c0_16 = arith.constant 0 : index
    %c0_17 = arith.constant 0 : index
    %20 = vector.load %arg8[%c0_16, %c0_17] : memref<16x32xf32, #tpu.memory_space<vmem>>, vector<16x32xf32>
    tpu.vector_store %arg8[%c0_16, %c0_17], %19 {strides = array<i32>} : memref<16x32xf32, #tpu.memory_space<vmem>>, vector<16x32xf32>,
    return
  }
  func.func @transform_0(%arg0: i32) -> (i32, i32) {
    %c0_i32 = arith.constant 0 : i32
    %c0_i32_0 = arith.constant 0 : i32
    return %arg0, %c0_i32 : i32, i32
  }
  func.func @transform_1(%arg0: i32) -> (i32, i32) {
    %c0_i32 = arith.constant 0 : i32
    %c0_i32_0 = arith.constant 0 : i32
    return %arg0, %c0_i32 : i32, i32
  }
  func.func @transform_2(%arg0: i32) -> (i32, i32) {
    %c0_i32 = arith.constant 0 : i32
    %c0_i32_0 = arith.constant 0 : i32
    %c0_i32_1 = arith.constant 0 : i32
    return %c0_i32, %c0_i32_0 : i32, i32
  }
  func.func @transform_3(%arg0: i32) -> (i32, i32) {
    %c0_i32 = arith.constant 0 : i32
    %c0_i32_0 = arith.constant 0 : i32
    %c0_i32_1 = arith.constant 0 : i32
    return %c0_i32, %c0_i32_0 : i32, i32
  }
  func.func @transform_4(%arg0: i32) -> (i32, i32) {
    %c0_i32 = arith.constant 0 : i32
    %c0_i32_0 = arith.constant 0 : i32
    %c0_i32_1 = arith.constant 0 : i32
    return %c0_i32, %c0_i32_0 : i32, i32
  }
  func.func @transform_5(%arg0: i32) -> (i32, i32) {
    %c0_i32 = arith.constant 0 : i32
    %c0_i32_0 = arith.constant 0 : i32
    %c0_i32_1 = arith.constant 0 : i32
    return %c0_i32, %c0_i32_0 : i32, i32
  }
  func.func @transform_6(%arg0: i32) -> (i32, i32) {
    %c0_i32 = arith.constant 0 : i32
    %c0_i32_0 = arith.constant 0 : i32
    %c0_i32_1 = arith.constant 0 : i32
    return %c0_i32, %c0_i32_0 : i32, i32
  }
  func.func @transform_7(%arg0: i32) -> (i32, i32) {
    %c0_i32 = arith.constant 0 : i32
    %c0_i32_0 = arith.constant 0 : i32
    return %arg0, %c0_i32 : i32, i32
  }
}

</mosaic_0001>

<llo_original>
// kernel: tpu_custom_call.1
$region0: #{tpu_custom_call.1}
  #allocation0 [shape = 'u32[]', space=smem, size = 0x4, offset = 0x4, fixed_abs, tag = 'smem constant byte address 0x4 - core index']
  #allocation1 [shape = 'u32[144,128]{1,0:T(1,128)}', space=vmem, size = 0x12000, scoped, tag = 'internal scratch']
  %s0 = inlined_call_operand.vmem [shape: f32[16,4], index: 0, kind: input, shape index: {}]
  %s1 = inlined_call_operand.vmem [shape: f32[16,4], index: 1, kind: input, shape index: {}]
  %s2 = inlined_call_operand.vmem [shape: bf16[4,32], index: 2, kind: input, shape index: {}]
  %s3 = inlined_call_operand.vmem [shape: bf16[4,32], index: 3, kind: input, shape index: {}]
  %s4 = inlined_call_operand.vmem [shape: f32[1,32], index: 4, kind: input, shape index: {}]
  %s5 = inlined_call_operand.vmem [shape: bf16[32,32], index: 5, kind: input, shape index: {}]
  %s6 = inlined_call_operand.vmem [shape: f32[1,32], index: 6, kind: input, shape index: {}]
  %s7 = inlined_call_operand.hbm [shape: f32[16,32], index: 7, kind: output, shape index: {}]
  %s8 = sld [smem:[#allocation0]]
  $region38: #{tpu_custom_call.1} parent=0
    _
  %s10 = ssub.s32 1, %s8
  %s11 = scalar_select 0, %s10, %s8
  $region1: #{tpu_custom_call.1} parent=0
    #allocation2 [shape = 'u8[8192]{0}', space=vmem, size = 0x2000, scoped, tag = 'output window, operand 0, single buffered']
    #allocation3 [shape = 's32[1]{0}', space=sflag, size = 0x4, scoped, tag = 'scoped memory for tpu_custom_call.1']
    %12 = vsyncpa [#allocation3], 0
    // Predicated region
    $region2: #{tpu_custom_call.1} parent=1 // pred_check
      _
    $region3: #{tpu_custom_call.1} parent=1 // pred_check_branch
      %14 = sbr.rel (0) target = $region5
    $region4: #{tpu_custom_call.1} parent=1 // pred_region
      _
    $region5: #{tpu_custom_call.1} parent=1 // pred_fallthru
      _
    // Predicated region
    $region6: #{tpu_custom_call.1} parent=1 // pred_check
      _
    $region7: #{tpu_custom_call.1} parent=1 // pred_check_branch
      %16 = sbr.rel (0) target = $region9
    $region8: #{tpu_custom_call.1} parent=1 // pred_region
      _
    $region9: #{tpu_custom_call.1} parent=1 // pred_fallthru
      _
    // Predicated region
    $region10: #{tpu_custom_call.1} parent=1 // pred_check
      _
    $region11: #{tpu_custom_call.1} parent=1 // pred_check_branch
      %18 = sbr.rel (0) target = $region13
    $region12: #{tpu_custom_call.1} parent=1 // pred_region
      _
    $region13: #{tpu_custom_call.1} parent=1 // pred_fallthru
      _
    // Predicated region
    $region14: #{tpu_custom_call.1} parent=1 // pred_check
      _
    $region15: #{tpu_custom_call.1} parent=1 // pred_check_branch
      %20 = sbr.rel (0) target = $region17
    $region16: #{tpu_custom_call.1} parent=1 // pred_region
      _
    $region17: #{tpu_custom_call.1} parent=1 // pred_fallthru
      _
    // Predicated region
    $region18: #{tpu_custom_call.1} parent=1 // pred_check
      _
    $region19: #{tpu_custom_call.1} parent=1 // pred_check_branch
      %22 = sbr.rel (0) target = $region21
    $region20: #{tpu_custom_call.1} parent=1 // pred_region
      _
    $region21: #{tpu_custom_call.1} parent=1 // pred_fallthru
      _
    // Predicated region
    $region22: #{tpu_custom_call.1} parent=1 // pred_check
      _
    $region23: #{tpu_custom_call.1} parent=1 // pred_check_branch
      %24 = sbr.rel (0) target = $region25
    $region24: #{tpu_custom_call.1} parent=1 // pred_region
      _
    $region25: #{tpu_custom_call.1} parent=1 // pred_fallthru
      _
    // Predicated region
    $region26: #{tpu_custom_call.1} parent=1 // pred_check
      _
    $region27: #{tpu_custom_call.1} parent=1 // pred_check_branch
      %26 = sbr.rel (0) target = $region29
    $region28: #{tpu_custom_call.1} parent=1 // pred_region
      _
    $region29: #{tpu_custom_call.1} parent=1 // pred_fallthru
      _
    %v28 = vld [vmem:[%s0] sm:$0xff]
    %v29 = vld [vmem:[%s0 + $0x8] sm:$0xff]
    %v30 = vpack.c.bf16 %v29, %v28
    %v31 = vld [vmem:[%s1] sm:$0xff]
    %v32 = vld [vmem:[%s1 + $0x8] sm:$0xff]
    %v33 = vpack.c.bf16 %v32, %v31
    %v34 = vld [vmem:[%s2] sm:$0x3]
    %v35 = vld [vmem:[%s3] sm:$0x3]
    %vm36 = vcmask 31744
    %v38 = vsel %vm36, %v33, 0
    %vm40 = vcmask 1041408
    %v42 = vsel %vm40, %v35, 0
    %44 = vmatprep.subr.bf16.mxu0 0
    %45 = vmatpush1.bf16.msra.mxu0 %v42
    %46 = vmatprep.subr.bf16.mxu0 0
    %47 = vmatpush1.bf16.msra.mxu0 0
    %48 = vmatprep.subr.bf16.mxu0 0
    %49 = vmatpush1.bf16.msra.mxu0 0
    %50 = vmatprep.subr.bf16.mxu0 0
    %51 = vmatpush1.bf16.msra.mxu0 0
    %52 = vmatprep.subr.bf16.mxu0 0
    %53 = vmatpush1.bf16.msra.mxu0 0
    %54 = vmatprep.subr.bf16.mxu0 0
    %55 = vmatpush1.bf16.msra.mxu0 0
    %56 = vmatprep.subr.bf16.mxu0 0
    %57 = vmatpush1.bf16.msra.mxu0 0
    %58 = vmatprep.subr.bf16.mxu0 0
    %59 = vmatpush1.bf16.msra.mxu0 0
    %60 = vmatprep.subr.bf16.mxu0 0
    %61 = vmatpush1.bf16.msra.mxu0 0
    %62 = vmatprep.subr.bf16.mxu0 0
    %63 = vmatpush1.bf16.msra.mxu0 0
    %64 = vmatprep.subr.bf16.mxu0 0
    %65 = vmatpush1.bf16.msra.mxu0 0
    %66 = vmatprep.subr.bf16.mxu0 0
    %67 = vmatpush1.bf16.msra.mxu0 0
    %68 = vmatprep.subr.bf16.mxu0 0
    %69 = vmatpush1.bf16.msra.mxu0 0
    %70 = vmatprep.subr.bf16.mxu0 0
    %71 = vmatpush1.bf16.msra.mxu0 0
    %72 = vmatprep.subr.bf16.mxu0 0
    %73 = vmatpush1.bf16.msra.mxu0 0
    %74 = vmatprep.subr.bf16.mxu0 0
    %75 = vmatpush1.bf16.msra.mxu0 0
    %76 = vmatprep.mubr.bf16.mxu0 0
    %77 = vmatmul.mubr.bf16.gmra.mrb[0].mxu0 %v38
    %v78 = vpop.f32.mrb[0].mxu0
    %v79 = vadd.f32 0.0, %v78
    %v80 = vpop.f32.mrb[0].mxu0
    %v81 = vpop.f32.mrb[0].mxu0
    %v82 = vadd.f32 0.0, %v81
    %v83 = vpop.f32.mrb[0].mxu0
    %84 = vdwg.mxu0
    %v86 = vsel %vm36, %v30, 0
    %v89 = vsel %vm40, %v34, 0
    %91 = vmatprep.subr.bf16.mxu0 0
    %92 = vmatpush1.bf16.msra.mxu0 %v89
    %93 = vmatprep.subr.bf16.mxu0 0
    %94 = vmatpush1.bf16.msra.mxu0 0
    %95 = vmatprep.subr.bf16.mxu0 0
    %96 = vmatpush1.bf16.msra.mxu0 0
    %97 = vmatprep.subr.bf16.mxu0 0
    %98 = vmatpush1.bf16.msra.mxu0 0
    %99 = vmatprep.subr.bf16.mxu0 0
    %100 = vmatpush1.bf16.msra.mxu0 0
    %101 = vmatprep.subr.bf16.mxu0 0
    %102 = vmatpush1.bf16.msra.mxu0 0
    %103 = vmatprep.subr.bf16.mxu0 0
    %104 = vmatpush1.bf16.msra.mxu0 0
    %105 = vmatprep.subr.bf16.mxu0 0
    %106 = vmatpush1.bf16.msra.mxu0 0
    %107 = vmatprep.subr.bf16.mxu0 0
    %108 = vmatpush1.bf16.msra.mxu0 0
    %109 = vmatprep.subr.bf16.mxu0 0
    %110 = vmatpush1.bf16.msra.mxu0 0
    %111 = vmatprep.subr.bf16.mxu0 0
    %112 = vmatpush1.bf16.msra.mxu0 0
    %113 = vmatprep.subr.bf16.mxu0 0
    %114 = vmatpush1.bf16.msra.mxu0 0
    %115 = vmatprep.subr.bf16.mxu0 0
    %116 = vmatpush1.bf16.msra.mxu0 0
    %117 = vmatprep.subr.bf16.mxu0 0
    %118 = vmatpush1.bf16.msra.mxu0 0
    %119 = vmatprep.subr.bf16.mxu0 0
    %120 = vmatpush1.bf16.msra.mxu0 0
    %121 = vmatprep.subr.bf16.mxu0 0
    %122 = vmatpush1.bf16.msra.mxu0 0
    %123 = vmatprep.mubr.bf16.mxu0 0
    %124 = vmatmul.mubr.bf16.gmra.mrb[0].mxu0 %v86
    %v125 = vpop.f32.mrb[0].mxu0
    %v126 = vadd.f32 %v79, %v125
    %v127 = vpop.f32.mrb[0].mxu0
    %v128 = vpop.f32.mrb[0].mxu0
    %v129 = vadd.f32 %v82, %v128
    %v130 = vpop.f32.mrb[0].mxu0
    %131 = vdwg.mxu0
    %v132 = vld [vmem:[%s4] sm:$0x1]
    %v134 = vlaneseq
    %v135 = vshrl.u32 %v134, 7
    %v136 = vsub.s32 0, %v135
    %v137 = vrot.slane %v132, %v136
    %v139 = vadd.f32 %v126, %v137
    %v140 = vadd.f32 %v129, %v137
    %v141 = vmax.f32 %v139, 0.0
    %v142 = vmax.f32 %v140, 0.0
    %v143 = vpack.c.bf16 %v142, %v141
    %v144 = vld [vmem:[%s5] sm:$0xf]
    %v145 = vld [vmem:[%s5 + $0x4] sm:$0xf]
    %v146 = vld [vmem:[%s5 + $0x8] sm:$0xf]
    %v147 = vld [vmem:[%s5 + $0xc] sm:$0xf]
    %v148 = vld [vmem:[%s6] sm:$0x1]
    %v150 = vlaneseq
    %v151 = vshrl.u32 %v150, 7
    %v152 = vsub.s32 0, %v151
    %v153 = vrot.slane %v148, %v152
    %v159 = vunpack.c.l.b16 %v144
    %v160 = vunpack.c.l.b16 %v145
    %v161 = vunpack.c.l.b16 %v146
    %v162 = vunpack.c.l.b16 %v147
    %v163 = vpack.c.b16 %v160, %v159
    %v164 = vpack.c.b16 %v162, %v161
    %vm167 = vcmask 261120
    %v169 = vsel %vm167, %v143, 0
    %171 = vmatprep.subr.bf16.mxu0 0
    %172 = vmatpush1.bf16.msra.mxu0 %v163
    %173 = vmatprep.subr.bf16.mxu0 0
    %174 = vmatpush1.bf16.msra.mxu0 %v164
    %175 = vmatprep.subr.bf16.mxu0 0
    %176 = vmatpush1.bf16.msra.mxu0 0
    %177 = vmatprep.subr.bf16.mxu0 0
    %178 = vmatpush1.bf16.msra.mxu0 0
    %179 = vmatprep.subr.bf16.mxu0 0
    %180 = vmatpush1.bf16.msra.mxu0 0
    %181 = vmatprep.subr.bf16.mxu0 0
    %182 = vmatpush1.bf16.msra.mxu0 0
    %183 = vmatprep.subr.bf16.mxu0 0
    %184 = vmatpush1.bf16.msra.mxu0 0
    %185 = vmatprep.subr.bf16.mxu0 0
    %186 = vmatpush1.bf16.msra.mxu0 0
    %187 = vmatprep.subr.bf16.mxu0 0
    %188 = vmatpush1.bf16.msra.mxu0 0
    %189 = vmatprep.subr.bf16.mxu0 0
    %190 = vmatpush1.bf16.msra.mxu0 0
    %191 = vmatprep.subr.bf16.mxu0 0
    %192 = vmatpush1.bf16.msra.mxu0 0
    %193 = vmatprep.subr.bf16.mxu0 0
    %194 = vmatpush1.bf16.msra.mxu0 0
    %195 = vmatprep.subr.bf16.mxu0 0
    %196 = vmatpush1.bf16.msra.mxu0 0
    %197 = vmatprep.subr.bf16.mxu0 0
    %198 = vmatpush1.bf16.msra.mxu0 0
    %199 = vmatprep.subr.bf16.mxu0 0
    %200 = vmatpush1.bf16.msra.mxu0 0
    %201 = vmatprep.subr.bf16.mxu0 0
    %202 = vmatpush1.bf16.msra.mxu0 0
    %203 = vmatprep.mubr.bf16.mxu0 0
    %204 = vmatmul.mubr.bf16.gmra.mrb[0].mxu0 %v169
    %v205 = vpop.f32.mrb[0].mxu0
    %v206 = vadd.f32 %v153, %v205
    %v207 = vpop.f32.mrb[0].mxu0
    %v208 = vpop.f32.mrb[0].mxu0
    %v209 = vadd.f32 %v153, %v208
    %v210 = vpop.f32.mrb[0].mxu0
    %211 = vdwg.mxu0
    %212 = vst.msk [vmem:[#allocation2] sm:$0xff] %vm167, %v206
    %213 = vst.msk [vmem:[#allocation2 + $0x8] sm:$0xff] %vm167, %v209
    // Predicated region
    $region30: #{tpu_custom_call.1} parent=1 // pred_check
      _
    $region31: #{tpu_custom_call.1} parent=1 // pred_check_branch
      %215 = sbr.rel (0) target = $region33
    $region32: #{tpu_custom_call.1} parent=1 // pred_region
      %s217 = ssub.s32 256, 256
      %218 = vsyncadd [#allocation3], %s217
      %s219 = sshll.u32 [#allocation2], 4
      %s220 = int_to_ptr.vmem [resolvable:$true] %s219
      %225 = dma.vmem_to_hbm [thread:$0]  %s220, 256, %s7, [#allocation3], 128, 128, 8
    $region33: #{tpu_custom_call.1} parent=1 // pred_fallthru
      _
    // Predicated region
    $region34: #{tpu_custom_call.1} parent=1 // pred_check
      _
    $region35: #{tpu_custom_call.1} parent=1 // pred_check_branch
      %227 = sbr.rel (0) target = $region37
    $region36: #{tpu_custom_call.1} parent=1 // pred_region
      %228 = dma.done [#allocation3], 256
    $region37: #{tpu_custom_call.1} parent=1 // pred_fallthru
      _
    %229 = vsyncpa [#allocation3], 1

</llo_original>
